<compile_context>
chip_gen: v7x
topology: tpu7x:2x2x1
jax: 0.10.0
libtpu: 0.0.40
codegen_flags: <defaults>
</compile_context>

<pallas_src>
import functools

import jax
import jax.numpy as jnp
from jax.experimental import pallas as pl
from jax.experimental.pallas import tpu as pltpu

LANE = 128
SUBLANE = 8
MAX_BLOCK_B = 1024  # rows per batch tile; working set stays far below VMEM at this size


def _round_up(x, m):
    return (x + m - 1) // m * m


@functools.lru_cache(maxsize=1)
def _num_tensorcores():
    """TensorCores a 'parallel' grid axis can shard across (v7x: 2, else 1)."""
    try:
        dev = jax.devices()[0]
        for attr in ("num_cores", "core_count"):
            n = getattr(dev, attr, None)
            if isinstance(n, int) and n > 0:
                return n
    except Exception:
        pass
    return 1


def _choose_tiling(batch):
    """Pick (block_b, padded_batch).

    Fewest grid steps possible (each step is serial overhead on 1-TC chips), with
    the step count kept a multiple of the TensorCore count (no idle TC on v7x).
    Padding is <= ~8 rows per grid step, never round_up(B, block_b).
    """
    b8 = _round_up(max(batch, 1), SUBLANE)
    n_cores = _num_tensorcores()
    n_tiles = pl.cdiv(b8, MAX_BLOCK_B)
    if n_cores > 1 and b8 >= 2 * SUBLANE * n_cores:
        n_tiles = _round_up(n_tiles, n_cores)
    bt = _round_up(pl.cdiv(b8, n_tiles), SUBLANE)
    return bt, n_tiles * bt


def _mlp_kernel(x_ref, w1_ref, b1_ref, w2_ref, b2_ref, w3_ref, b3_ref, o_ref):
    # Layer 1: Linear (bf16 MXU operands, f32 accumulation) + bias + ReLU (f32 VPU).
    x = x_ref[...].astype(jnp.bfloat16)
    h1 = jnp.dot(x, w1_ref[...], preferred_element_type=jnp.float32) + b1_ref[...]
    h1 = jnp.maximum(h1, 0.0)
    # Dropout(0.1) -> identity at inference.

    # Layer 2: Linear + bias + ReLU.
    h2 = jnp.dot(h1.astype(jnp.bfloat16), w2_ref[...],
                 preferred_element_type=jnp.float32) + b2_ref[...]
    h2 = jnp.maximum(h2, 0.0)

    # Output layer (option axis pre-padded to 128 lanes -> unmasked lane-dense vst).
    q = jnp.dot(h2.astype(jnp.bfloat16), w3_ref[...],
                preferred_element_type=jnp.float32) + b3_ref[...]
    o_ref[...] = q.astype(o_ref.dtype)


def pack_params(params, num_options):
    """One-time packing of f32 (in, out)-layout params for the kernel.

    Hoists the bf16 casts and the 128-lane zero-padding of the output layer out
    of the per-call forward path (they were per-call XLA ops before).
    """
    opt_pad = _round_up(num_options, LANE)
    w3 = params["w3"].astype(jnp.bfloat16)
    b3 = params["b3"].reshape(1, -1).astype(jnp.float32)
    return dict(
        w1=params["w1"].astype(jnp.bfloat16),
        b1=params["b1"].reshape(1, -1).astype(jnp.float32),
        w2=params["w2"].astype(jnp.bfloat16),
        b2=params["b2"].reshape(1, -1).astype(jnp.float32),
        w3=jnp.zeros((w3.shape[0], opt_pad), jnp.bfloat16).at[:, :num_options].set(w3),
        b3=jnp.zeros((1, opt_pad), jnp.float32).at[:, :num_options].set(b3),
    )


@functools.partial(jax.jit, static_argnames=("num_options",))
def meta_controller_forward(state, packed, *, num_options):
    """state: (B, state_dim) float; packed: output of pack_params().

    Returns Q-values of shape (B, num_options), float32.
    """
    w1, b1 = packed["w1"], packed["b1"]
    w2, b2 = packed["w2"], packed["b2"]
    w3, b3 = packed["w3"], packed["b3"]

    B, state_dim = state.shape
    h1_dim = w1.shape[1]
    h2_dim = w2.shape[1]
    opt_pad = w3.shape[1]

    bt, b_pad = _choose_tiling(B)
    if b_pad != B:
        state = jnp.pad(state, ((0, b_pad - B), (0, 0)))
    grid = b_pad // bt

    flops = 2 * b_pad * (state_dim * h1_dim + h1_dim * h2_dim + h2_dim * opt_pad)
    bytes_accessed = (
        b_pad * state_dim * state.dtype.itemsize        # activations in
        + (w1.size + w2.size + w3.size) * 2             # bf16 weights
        + (b1.size + b2.size + b3.size) * 4             # f32 biases
        + b_pad * opt_pad * 2                           # bf16 Q writeback
    )

    # Weights / biases: constant block index -> DMA'd once, stay VMEM-resident.
    resident = lambda a: pl.BlockSpec(a.shape, lambda i: (0, 0))

    q_padded = pl.pallas_call(
        _mlp_kernel,
        out_shape=jax.ShapeDtypeStruct((b_pad, opt_pad), jnp.bfloat16),
        grid=(grid,),
        in_specs=[
            pl.BlockSpec((bt, state_dim), lambda i: (i, 0)),   # state tile
            resident(w1), resident(b1),
            resident(w2), resident(b2),
            resident(w3), resident(b3),
        ],
        out_specs=pl.BlockSpec((bt, opt_pad), lambda i: (i, 0)),
        compiler_params=pltpu.CompilerParams(
            dimension_semantics=("parallel",)),
        cost_estimate=pl.CostEstimate(
            flops=flops, transcendentals=0, bytes_accessed=bytes_accessed),
    )(state, w1, b1, w2, b2, w3, b3)

    return q_padded[:B, :num_options].astype(jnp.float32)


def init_params(key, state_dim, num_options, hidden_dims=(128, 128)):
    """Deterministic init mimicking nn.Linear default (uniform +-1/sqrt(fan_in))."""
    params = {}
    dims = [state_dim, *hidden_dims, num_options]
    for i, name in enumerate(["1", "2", "3"]):
        fan_in, fan_out = dims[i], dims[i + 1]
        key, kw, kb = jax.random.split(key, 3)
        bound = 1.0 / jnp.sqrt(jnp.float32(fan_in))
        # Stored as (in, out): kernel computes x @ W (transposed vs. PyTorch's (out, in)).
        params[f"w{name}"] = jax.random.uniform(
            kw, (fan_in, fan_out), jnp.float32, -bound, bound)
        params[f"b{name}"] = jax.random.uniform(
            kb, (1, fan_out), jnp.float32, -bound, bound)
    return params


def reference_forward(state, params):
    h = jnp.maximum(state @ params["w1"] + params["b1"], 0.0)
    h = jnp.maximum(h @ params["w2"] + params["b2"], 0.0)
    return h @ params["w3"] + params["b3"]


if __name__ == "__main__":
    key = jax.random.PRNGKey(0)
    key, kx1, kx2, kp = jax.random.split(key, 4)

    state_dim = 32
    num_options = 8
    params = init_params(kp, state_dim, num_options, hidden_dims=(128, 128))
    packed = pack_params(params, num_options)   # one-time packing, hoisted out of forward

    # Case 1: tiny batch (select_option-style usage; exercises sublane padding).
    state_small = jax.random.normal(kx1, (2, state_dim), jnp.float32)
    q_small = jax.block_until_ready(
        meta_controller_forward(state_small, packed, num_options=num_options))
    assert q_small.shape == (2, num_options)
    assert jnp.allclose(q_small, reference_forward(state_small, params),
                        atol=3e-2, rtol=3e-2), "small-batch mismatch vs reference"

    # Case 2: awkward batch size (exercises near-exact tiling: no round-up-to-block pad,
    # one grid step on 1-TC chips, an even number of steps on 2-TC chips).
    state_big = jax.random.normal(kx2, (300, state_dim), jnp.float32)
    q_big = jax.block_until_ready(
        meta_controller_forward(state_big, packed, num_options=num_options))
    assert q_big.shape == (300, num_options)
    assert jnp.allclose(q_big, reference_forward(state_big, params),
                        atol=3e-2, rtol=3e-2), "batched mismatch vs reference"

    print("KERNEL_OK")
</pallas_src>

<mosaic_0001>
module attributes {stable_mosaic.version = 11 : i64} {
  func.func @_mlp_kernel(%arg0: i32, %arg1: memref<8x32xf32, #tpu.memory_space<vmem>>, %arg2: memref<32x128xbf16, #tpu.memory_space<vmem>>, %arg3: memref<1x128xf32, #tpu.memory_space<vmem>>, %arg4: memref<128x128xbf16, #tpu.memory_space<vmem>>, %arg5: memref<1x128xf32, #tpu.memory_space<vmem>>, %arg6: memref<128x128xbf16, #tpu.memory_space<vmem>>, %arg7: memref<1x128xf32, #tpu.memory_space<vmem>>, %arg8: memref<8x128xbf16, #tpu.memory_space<vmem>>) attributes {dimension_semantics = [#tpu.dimension_semantics<parallel>], iteration_bounds = array<i64: 1>, scalar_prefetch = 0 : i64, scratch_operands = 0 : i64, tpu.core_type = #tpu.core_type<tc>, window_params = [{transform_indices = @transform_0, window_bounds = array<i64: 8, 32>}, {pipeline_mode = #tpu.pipeline_mode<synchronous>, transform_indices = @transform_1, window_bounds = array<i64: 32, 128>}, {pipeline_mode = #tpu.pipeline_mode<synchronous>, transform_indices = @transform_2, window_bounds = array<i64: 1, 128>}, {pipeline_mode = #tpu.pipeline_mode<synchronous>, transform_indices = @transform_3, window_bounds = array<i64: 128, 128>}, {pipeline_mode = #tpu.pipeline_mode<synchronous>, transform_indices = @transform_4, window_bounds = array<i64: 1, 128>}, {pipeline_mode = #tpu.pipeline_mode<synchronous>, transform_indices = @transform_5, window_bounds = array<i64: 128, 128>}, {pipeline_mode = #tpu.pipeline_mode<synchronous>, transform_indices = @transform_6, window_bounds = array<i64: 1, 128>}, {transform_indices = @transform_7, window_bounds = array<i64: 8, 128>}]} {
    %c0 = arith.constant 0 : index
    %c0_0 = arith.constant 0 : index
    %0 = vector.load %arg1[%c0, %c0_0] : memref<8x32xf32, #tpu.memory_space<vmem>>, vector<8x32xf32>
    %1 = arith.truncf %0 : vector<8x32xf32> to vector<8x32xbf16>
    %c0_1 = arith.constant 0 : index
    %c0_2 = arith.constant 0 : index
    %2 = vector.load %arg2[%c0_1, %c0_2] : memref<32x128xbf16, #tpu.memory_space<vmem>>, vector<32x128xbf16>
    %cst = arith.constant dense<0.000000e+00> : vector<8x128xf32>
    %3 = tpu.matmul %1, %2, %cst {dimension_numbers = #tpu.dot_dimension_numbers<[1], [0], [0], [1], [0, 0, 1, 1], [], []>} : vector<8x32xbf16>, vector<32x128xbf16>, vector<8x128xf32> -> vector<8x128xf32>
    %c0_3 = arith.constant 0 : index
    %c0_4 = arith.constant 0 : index
    %4 = vector.load %arg3[%c0_3, %c0_4] : memref<1x128xf32, #tpu.memory_space<vmem>>, vector<1x128xf32>
    %5 = vector.broadcast %4 : vector<1x128xf32> to vector<8x128xf32>
    %6 = arith.addf %3, %5 : vector<8x128xf32>
    %cst_5 = arith.constant 0.000000e+00 : f32
    %7 = vector.broadcast %cst_5 : f32 to vector<8x128xf32>
    %8 = arith.maximumf %6, %7 : vector<8x128xf32>
    %9 = arith.truncf %8 : vector<8x128xf32> to vector<8x128xbf16>
    %c0_6 = arith.constant 0 : index
    %c0_7 = arith.constant 0 : index
    %10 = vector.load %arg4[%c0_6, %c0_7] : memref<128x128xbf16, #tpu.memory_space<vmem>>, vector<128x128xbf16>
    %cst_8 = arith.constant dense<0.000000e+00> : vector<8x128xf32>
    %11 = tpu.matmul %9, %10, %cst_8 {dimension_numbers = #tpu.dot_dimension_numbers<[1], [0], [0], [1], [0, 0, 1, 1], [], []>} : vector<8x128xbf16>, vector<128x128xbf16>, vector<8x128xf32> -> vector<8x128xf32>
    %c0_9 = arith.constant 0 : index
    %c0_10 = arith.constant 0 : index
    %12 = vector.load %arg5[%c0_9, %c0_10] : memref<1x128xf32, #tpu.memory_space<vmem>>, vector<1x128xf32>
    %13 = vector.broadcast %12 : vector<1x128xf32> to vector<8x128xf32>
    %14 = arith.addf %11, %13 : vector<8x128xf32>
    %cst_11 = arith.constant 0.000000e+00 : f32
    %15 = vector.broadcast %cst_11 : f32 to vector<8x128xf32>
    %16 = arith.maximumf %14, %15 : vector<8x128xf32>
    %17 = arith.truncf %16 : vector<8x128xf32> to vector<8x128xbf16>
    %c0_12 = arith.constant 0 : index
    %c0_13 = arith.constant 0 : index
    %18 = vector.load %arg6[%c0_12, %c0_13] : memref<128x128xbf16, #tpu.memory_space<vmem>>, vector<128x128xbf16>
    %cst_14 = arith.constant dense<0.000000e+00> : vector<8x128xf32>
    %19 = tpu.matmul %17, %18, %cst_14 {dimension_numbers = #tpu.dot_dimension_numbers<[1], [0], [0], [1], [0, 0, 1, 1], [], []>} : vector<8x128xbf16>, vector<128x128xbf16>, vector<8x128xf32> -> vector<8x128xf32>
    %c0_15 = arith.constant 0 : index
    %c0_16 = arith.constant 0 : index
    %20 = vector.load %arg7[%c0_15, %c0_16] : memref<1x128xf32, #tpu.memory_space<vmem>>, vector<1x128xf32>
    %21 = vector.broadcast %20 : vector<1x128xf32> to vector<8x128xf32>
    %22 = arith.addf %19, %21 : vector<8x128xf32>
    %23 = arith.truncf %22 : vector<8x128xf32> to vector<8x128xbf16>
    %c0_17 = arith.constant 0 : index
    %c0_18 = arith.constant 0 : index
    %24 = vector.load %arg8[%c0_17, %c0_18] : memref<8x128xbf16, #tpu.memory_space<vmem>>, vector<8x128xbf16>
    tpu.vector_store %arg8[%c0_17, %c0_18], %23 {strides = array<i32>} : memref<8x128xbf16, #tpu.memory_space<vmem>>, vector<8x128xbf16>,
    return
  }
  func.func @transform_0(%arg0: i32) -> (i32, i32) {
    %c0_i32 = arith.constant 0 : i32
    %c0_i32_0 = arith.constant 0 : i32
    return %arg0, %c0_i32 : i32, i32
  }
  func.func @transform_1(%arg0: i32) -> (i32, i32) {
    %c0_i32 = arith.constant 0 : i32
    %c0_i32_0 = arith.constant 0 : i32
    %c0_i32_1 = arith.constant 0 : i32
    return %c0_i32, %c0_i32_0 : i32, i32
  }
  func.func @transform_2(%arg0: i32) -> (i32, i32) {
    %c0_i32 = arith.constant 0 : i32
    %c0_i32_0 = arith.constant 0 : i32
    %c0_i32_1 = arith.constant 0 : i32
    return %c0_i32, %c0_i32_0 : i32, i32
  }
  func.func @transform_3(%arg0: i32) -> (i32, i32) {
    %c0_i32 = arith.constant 0 : i32
    %c0_i32_0 = arith.constant 0 : i32
    %c0_i32_1 = arith.constant 0 : i32
    return %c0_i32, %c0_i32_0 : i32, i32
  }
  func.func @transform_4(%arg0: i32) -> (i32, i32) {
    %c0_i32 = arith.constant 0 : i32
    %c0_i32_0 = arith.constant 0 : i32
    %c0_i32_1 = arith.constant 0 : i32
    return %c0_i32, %c0_i32_0 : i32, i32
  }
  func.func @transform_5(%arg0: i32) -> (i32, i32) {
    %c0_i32 = arith.constant 0 : i32
    %c0_i32_0 = arith.constant 0 : i32
    %c0_i32_1 = arith.constant 0 : i32
    return %c0_i32, %c0_i32_0 : i32, i32
  }
  func.func @transform_6(%arg0: i32) -> (i32, i32) {
    %c0_i32 = arith.constant 0 : i32
    %c0_i32_0 = arith.constant 0 : i32
    %c0_i32_1 = arith.constant 0 : i32
    return %c0_i32, %c0_i32_0 : i32, i32
  }
  func.func @transform_7(%arg0: i32) -> (i32, i32) {
    %c0_i32 = arith.constant 0 : i32
    %c0_i32_0 = arith.constant 0 : i32
    return %arg0, %c0_i32 : i32, i32
  }
}

</mosaic_0001>

<llo_original>
// kernel: meta_controller_forward.1
$region0: #{meta_controller_forward.1}
  #allocation0 [shape = 'u32[]', space=smem, size = 0x4, offset = 0x4, fixed_abs, tag = 'smem constant byte address 0x4 - core index']
  #allocation1 [shape = 'u32[144,128]{1,0:T(1,128)}', space=vmem, size = 0x12000, scoped, tag = 'internal scratch']
  %s0 = inlined_call_operand.vmem [shape: f32[8,32], index: 0, kind: input, shape index: {}]
  %s1 = inlined_call_operand.vmem [shape: bf16[32,128], index: 1, kind: input, shape index: {}]
  %s2 = inlined_call_operand.vmem [shape: f32[1,128], index: 2, kind: input, shape index: {}]
  %s3 = inlined_call_operand.hbm [shape: bf16[128,128], index: 3, kind: input, shape index: {}]
  %s4 = inlined_call_operand.vmem [shape: f32[1,128], index: 4, kind: input, shape index: {}]
  %s5 = inlined_call_operand.hbm [shape: bf16[128,128], index: 5, kind: input, shape index: {}]
  %s6 = inlined_call_operand.vmem [shape: f32[1,128], index: 6, kind: input, shape index: {}]
  %s7 = inlined_call_operand.vmem [shape: bf16[8,128], index: 7, kind: output, shape index: {}]
  %s8 = sld [smem:[#allocation0]]
  $region46: #{meta_controller_forward.1} parent=0
    _
  %s10 = ssub.s32 1, %s8
  %s11 = scalar_select 0, %s10, %s8
  $region1: #{meta_controller_forward.1} parent=0
    #allocation2 [shape = 'u8[32768]{0}', space=vmem, size = 0x8000, scoped, tag = 'input window, operand 3, single buffered']
    #allocation3 [shape = 's32[1]{0}', space=sflag, size = 0x4, scoped, tag = 'scoped memory for meta_controller_forward.1']
    #allocation4 [shape = 'u8[32768]{0}', space=vmem, size = 0x8000, scoped, tag = 'input window, operand 5, single buffered']
    #allocation5 [shape = 's32[1]{0}', space=sflag, size = 0x4, scoped, tag = 'scoped memory for meta_controller_forward.1']
    %12 = vsyncpa [#allocation3], 0
    %13 = vsyncpa [#allocation5], 0
    // Predicated region
    $region2: #{meta_controller_forward.1} parent=1 // pred_check
      _
    $region3: #{meta_controller_forward.1} parent=1 // pred_check_branch
      %15 = sbr.rel (0) target = $region5
    $region4: #{meta_controller_forward.1} parent=1 // pred_region
      _
    $region5: #{meta_controller_forward.1} parent=1 // pred_fallthru
      _
    // Predicated region
    $region6: #{meta_controller_forward.1} parent=1 // pred_check
      _
    $region7: #{meta_controller_forward.1} parent=1 // pred_check_branch
      %17 = sbr.rel (0) target = $region9
    $region8: #{meta_controller_forward.1} parent=1 // pred_region
      _
    $region9: #{meta_controller_forward.1} parent=1 // pred_fallthru
      _
    // Predicated region
    $region10: #{meta_controller_forward.1} parent=1 // pred_check
      _
    $region11: #{meta_controller_forward.1} parent=1 // pred_check_branch
      %19 = sbr.rel (0) target = $region13
    $region12: #{meta_controller_forward.1} parent=1 // pred_region
      _
    $region13: #{meta_controller_forward.1} parent=1 // pred_fallthru
      _
    // Predicated region
    $region14: #{meta_controller_forward.1} parent=1 // pred_check
      _
    $region15: #{meta_controller_forward.1} parent=1 // pred_check_branch
      %21 = sbr.rel (0) target = $region17
    $region16: #{meta_controller_forward.1} parent=1 // pred_region
      %s23 = ssub.s32 1024, 1024
      %24 = vsyncadd [#allocation3], %s23
      %s25 = sshll.u32 [#allocation2], 4
      %s26 = int_to_ptr.vmem [resolvable:$true] %s25
      %31 = dma.hbm_to_vmem [thread:$0]  %s3, 1024, %s26, [#allocation3], 64, 64, 4
    $region17: #{meta_controller_forward.1} parent=1 // pred_fallthru
      _
    // Predicated region
    $region18: #{meta_controller_forward.1} parent=1 // pred_check
      _
    $region19: #{meta_controller_forward.1} parent=1 // pred_check_branch
      %33 = sbr.rel (0) target = $region21
    $region20: #{meta_controller_forward.1} parent=1 // pred_region
      _
    $region21: #{meta_controller_forward.1} parent=1 // pred_fallthru
      _
    // Predicated region
    $region22: #{meta_controller_forward.1} parent=1 // pred_check
      _
    $region23: #{meta_controller_forward.1} parent=1 // pred_check_branch
      %35 = sbr.rel (0) target = $region25
    $region24: #{meta_controller_forward.1} parent=1 // pred_region
      %s37 = ssub.s32 1024, 1024
      %38 = vsyncadd [#allocation5], %s37
      %s39 = sshll.u32 [#allocation4], 4
      %s40 = int_to_ptr.vmem [resolvable:$true] %s39
      %45 = dma.hbm_to_vmem [thread:$0]  %s5, 1024, %s40, [#allocation5], 64, 64, 4
    $region25: #{meta_controller_forward.1} parent=1 // pred_fallthru
      _
    // Predicated region
    $region26: #{meta_controller_forward.1} parent=1 // pred_check
      _
    $region27: #{meta_controller_forward.1} parent=1 // pred_check_branch
      %47 = sbr.rel (0) target = $region29
    $region28: #{meta_controller_forward.1} parent=1 // pred_region
      _
    $region29: #{meta_controller_forward.1} parent=1 // pred_fallthru
      _
    // Predicated region
    $region30: #{meta_controller_forward.1} parent=1 // pred_check
      _
    $region31: #{meta_controller_forward.1} parent=1 // pred_check_branch
      %49 = sbr.rel (0) target = $region33
    $region32: #{meta_controller_forward.1} parent=1 // pred_region
      %50 = dma.done [#allocation3], 1024
    $region33: #{meta_controller_forward.1} parent=1 // pred_fallthru
      _
    // Predicated region
    $region34: #{meta_controller_forward.1} parent=1 // pred_check
      _
    $region35: #{meta_controller_forward.1} parent=1 // pred_check_branch
      %52 = sbr.rel (0) target = $region37
    $region36: #{meta_controller_forward.1} parent=1 // pred_region
      %53 = dma.done [#allocation5], 1024
    $region37: #{meta_controller_forward.1} parent=1 // pred_fallthru
      _
    %v55 = vld [vmem:[%s0] sm:$0xff]
    %v56 = vpack.c.bf16 %v55, %v55
    %v57 = vld [vmem:[%s1] sm:$0xf]
    %v58 = vld [vmem:[%s1 + $0x4] sm:$0xf]
    %v59 = vld [vmem:[%s1 + $0x8] sm:$0xf]
    %v60 = vld [vmem:[%s1 + $0xc] sm:$0xf]
    %v61 = vld [vmem:[%s2] sm:$0x1]
    %v63 = vlaneseq
    %v64 = vshrl.u32 %v63, 7
    %v65 = vsub.s32 0, %v64
    %v66 = vrot.slane %v61, %v65
    %v72 = vunpack.c.l.b16 %v57
    %v73 = vunpack.c.l.b16 %v58
    %v74 = vunpack.c.l.b16 %v59
    %v75 = vunpack.c.l.b16 %v60
    %v76 = vpack.c.b16 %v73, %v72
    %v77 = vpack.c.b16 %v75, %v74
    %vm80 = vcmask 261120
    %v82 = vsel %vm80, %v56, 0
    %84 = vmatprep.subr.bf16.mxu0 0
    %85 = vmatpush1.bf16.msra.mxu0 %v76
    %86 = vmatprep.subr.bf16.mxu0 0
    %87 = vmatpush1.bf16.msra.mxu0 %v77
    %88 = vmatprep.subr.bf16.mxu0 0
    %89 = vmatpush1.bf16.msra.mxu0 0
    %90 = vmatprep.subr.bf16.mxu0 0
    %91 = vmatpush1.bf16.msra.mxu0 0
    %92 = vmatprep.subr.bf16.mxu0 0
    %93 = vmatpush1.bf16.msra.mxu0 0
    %94 = vmatprep.subr.bf16.mxu0 0
    %95 = vmatpush1.bf16.msra.mxu0 0
    %96 = vmatprep.subr.bf16.mxu0 0
    %97 = vmatpush1.bf16.msra.mxu0 0
    %98 = vmatprep.subr.bf16.mxu0 0
    %99 = vmatpush1.bf16.msra.mxu0 0
    %100 = vmatprep.subr.bf16.mxu0 0
    %101 = vmatpush1.bf16.msra.mxu0 0
    %102 = vmatprep.subr.bf16.mxu0 0
    %103 = vmatpush1.bf16.msra.mxu0 0
    %104 = vmatprep.subr.bf16.mxu0 0
    %105 = vmatpush1.bf16.msra.mxu0 0
    %106 = vmatprep.subr.bf16.mxu0 0
    %107 = vmatpush1.bf16.msra.mxu0 0
    %108 = vmatprep.subr.bf16.mxu0 0
    %109 = vmatpush1.bf16.msra.mxu0 0
    %110 = vmatprep.subr.bf16.mxu0 0
    %111 = vmatpush1.bf16.msra.mxu0 0
    %112 = vmatprep.subr.bf16.mxu0 0
    %113 = vmatpush1.bf16.msra.mxu0 0
    %114 = vmatprep.subr.bf16.mxu0 0
    %115 = vmatpush1.bf16.msra.mxu0 0
    %116 = vmatprep.mubr.bf16.mxu0 0
    %117 = vmatmul.mubr.bf16.gmra.mrb[0].mxu0 %v82
    %v118 = vpop.f32.mrb[0].mxu0
    %v119 = vadd.f32 %v66, %v118
    %v120 = vpop.f32.mrb[0].mxu0
    %v121 = vpop.f32.mrb[0].mxu0
    %v122 = vpop.f32.mrb[0].mxu0
    %123 = vdwg.mxu0
    %v124 = vmax.f32 %v119, 0.0
    %v125 = vpack.c.bf16 %v124, %v124
    %v126 = vld [vmem:[#allocation2] sm:$0xf]
    %v127 = vld [vmem:[#allocation2 + $0x4] sm:$0xf]
    %v128 = vld [vmem:[#allocation2 + $0x8] sm:$0xf]
    %v129 = vld [vmem:[#allocation2 + $0xc] sm:$0xf]
    %v130 = vld [vmem:[#allocation2 + $0x10] sm:$0xf]
    %v131 = vld [vmem:[#allocation2 + $0x14] sm:$0xf]
    %v132 = vld [vmem:[#allocation2 + $0x18] sm:$0xf]
    %v133 = vld [vmem:[#allocation2 + $0x1c] sm:$0xf]
    %v134 = vld [vmem:[#allocation2 + $0x20] sm:$0xf]
    %v135 = vld [vmem:[#allocation2 + $0x24] sm:$0xf]
    %v136 = vld [vmem:[#allocation2 + $0x28] sm:$0xf]
    %v137 = vld [vmem:[#allocation2 + $0x2c] sm:$0xf]
    %v138 = vld [vmem:[#allocation2 + $0x30] sm:$0xf]
    %v139 = vld [vmem:[#allocation2 + $0x34] sm:$0xf]
    %v140 = vld [vmem:[#allocation2 + $0x38] sm:$0xf]
    %v141 = vld [vmem:[#allocation2 + $0x3c] sm:$0xf]
    %v142 = vld [vmem:[%s4] sm:$0x1]
    %v144 = vlaneseq
    %v145 = vshrl.u32 %v144, 7
    %v146 = vsub.s32 0, %v145
    %v147 = vrot.slane %v142, %v146
    %v165 = vunpack.c.l.b16 %v126
    %v166 = vunpack.c.l.b16 %v127
    %v167 = vunpack.c.l.b16 %v128
    %v168 = vunpack.c.l.b16 %v129
    %v169 = vunpack.c.l.b16 %v130
    %v170 = vunpack.c.l.b16 %v131
    %v171 = vunpack.c.l.b16 %v132
    %v172 = vunpack.c.l.b16 %v133
    %v173 = vunpack.c.l.b16 %v134
    %v174 = vunpack.c.l.b16 %v135
    %v175 = vunpack.c.l.b16 %v136
    %v176 = vunpack.c.l.b16 %v137
    %v177 = vunpack.c.l.b16 %v138
    %v178 = vunpack.c.l.b16 %v139
    %v179 = vunpack.c.l.b16 %v140
    %v180 = vunpack.c.l.b16 %v141
    %v181 = vpack.c.b16 %v166, %v165
    %v182 = vpack.c.b16 %v168, %v167
    %v183 = vpack.c.b16 %v170, %v169
    %v184 = vpack.c.b16 %v172, %v171
    %v185 = vpack.c.b16 %v174, %v173
    %v186 = vpack.c.b16 %v176, %v175
    %v187 = vpack.c.b16 %v178, %v177
    %v188 = vpack.c.b16 %v180, %v179
    %197 = vmatprep.subr.bf16.mxu0 0
    %198 = vmatpush1.bf16.msra.mxu0 %v181
    %199 = vmatprep.subr.bf16.mxu0 0
    %200 = vmatpush1.bf16.msra.mxu0 %v182
    %201 = vmatprep.subr.bf16.mxu0 0
    %202 = vmatpush1.bf16.msra.mxu0 %v183
    %203 = vmatprep.subr.bf16.mxu0 0
    %204 = vmatpush1.bf16.msra.mxu0 %v184
    %205 = vmatprep.subr.bf16.mxu0 0
    %206 = vmatpush1.bf16.msra.mxu0 %v185
    %207 = vmatprep.subr.bf16.mxu0 0
    %208 = vmatpush1.bf16.msra.mxu0 %v186
    %209 = vmatprep.subr.bf16.mxu0 0
    %210 = vmatpush1.bf16.msra.mxu0 %v187
    %211 = vmatprep.subr.bf16.mxu0 0
    %212 = vmatpush1.bf16.msra.mxu0 %v188
    %213 = vmatprep.subr.bf16.mxu0 0
    %214 = vmatpush1.bf16.msra.mxu0 0
    %215 = vmatprep.subr.bf16.mxu0 0
    %216 = vmatpush1.bf16.msra.mxu0 0
    %217 = vmatprep.subr.bf16.mxu0 0
    %218 = vmatpush1.bf16.msra.mxu0 0
    %219 = vmatprep.subr.bf16.mxu0 0
    %220 = vmatpush1.bf16.msra.mxu0 0
    %221 = vmatprep.subr.bf16.mxu0 0
    %222 = vmatpush1.bf16.msra.mxu0 0
    %223 = vmatprep.subr.bf16.mxu0 0
    %224 = vmatpush1.bf16.msra.mxu0 0
    %225 = vmatprep.subr.bf16.mxu0 0
    %226 = vmatpush1.bf16.msra.mxu0 0
    %227 = vmatprep.subr.bf16.mxu0 0
    %228 = vmatpush1.bf16.msra.mxu0 0
    %229 = vmatprep.mubr.bf16.mxu0 0
    %230 = vmatmul.mubr.bf16.gmra.mrb[0].mxu0 %v125
    %v231 = vpop.f32.mrb[0].mxu0
    %v232 = vadd.f32 %v147, %v231
    %v233 = vpop.f32.mrb[0].mxu0
    %v234 = vpop.f32.mrb[0].mxu0
    %v235 = vpop.f32.mrb[0].mxu0
    %236 = vdwg.mxu0
    %v237 = vmax.f32 %v232, 0.0
    %v238 = vpack.c.bf16 %v237, %v237
    %v239 = vld [vmem:[#allocation4] sm:$0xf]
    %v240 = vld [vmem:[#allocation4 + $0x4] sm:$0xf]
    %v241 = vld [vmem:[#allocation4 + $0x8] sm:$0xf]
    %v242 = vld [vmem:[#allocation4 + $0xc] sm:$0xf]
    %v243 = vld [vmem:[#allocation4 + $0x10] sm:$0xf]
    %v244 = vld [vmem:[#allocation4 + $0x14] sm:$0xf]
    %v245 = vld [vmem:[#allocation4 + $0x18] sm:$0xf]
    %v246 = vld [vmem:[#allocation4 + $0x1c] sm:$0xf]
    %v247 = vld [vmem:[#allocation4 + $0x20] sm:$0xf]
    %v248 = vld [vmem:[#allocation4 + $0x24] sm:$0xf]
    %v249 = vld [vmem:[#allocation4 + $0x28] sm:$0xf]
    %v250 = vld [vmem:[#allocation4 + $0x2c] sm:$0xf]
    %v251 = vld [vmem:[#allocation4 + $0x30] sm:$0xf]
    %v252 = vld [vmem:[#allocation4 + $0x34] sm:$0xf]
    %v253 = vld [vmem:[#allocation4 + $0x38] sm:$0xf]
    %v254 = vld [vmem:[#allocation4 + $0x3c] sm:$0xf]
    %v255 = vld [vmem:[%s6] sm:$0x1]
    %v257 = vlaneseq
    %v258 = vshrl.u32 %v257, 7
    %v259 = vsub.s32 0, %v258
    %v260 = vrot.slane %v255, %v259
    %v278 = vunpack.c.l.b16 %v239
    %v279 = vunpack.c.l.b16 %v240
    %v280 = vunpack.c.l.b16 %v241
    %v281 = vunpack.c.l.b16 %v242
    %v282 = vunpack.c.l.b16 %v243
    %v283 = vunpack.c.l.b16 %v244
    %v284 = vunpack.c.l.b16 %v245
    %v285 = vunpack.c.l.b16 %v246
    %v286 = vunpack.c.l.b16 %v247
    %v287 = vunpack.c.l.b16 %v248
    %v288 = vunpack.c.l.b16 %v249
    %v289 = vunpack.c.l.b16 %v250
    %v290 = vunpack.c.l.b16 %v251
    %v291 = vunpack.c.l.b16 %v252
    %v292 = vunpack.c.l.b16 %v253
    %v293 = vunpack.c.l.b16 %v254
    %v294 = vpack.c.b16 %v279, %v278
    %v295 = vpack.c.b16 %v281, %v280
    %v296 = vpack.c.b16 %v283, %v282
    %v297 = vpack.c.b16 %v285, %v284
    %v298 = vpack.c.b16 %v287, %v286
    %v299 = vpack.c.b16 %v289, %v288
    %v300 = vpack.c.b16 %v291, %v290
    %v301 = vpack.c.b16 %v293, %v292
    %310 = vmatprep.subr.bf16.mxu0 0
    %311 = vmatpush1.bf16.msra.mxu0 %v294
    %312 = vmatprep.subr.bf16.mxu0 0
    %313 = vmatpush1.bf16.msra.mxu0 %v295
    %314 = vmatprep.subr.bf16.mxu0 0
    %315 = vmatpush1.bf16.msra.mxu0 %v296
    %316 = vmatprep.subr.bf16.mxu0 0
    %317 = vmatpush1.bf16.msra.mxu0 %v297
    %318 = vmatprep.subr.bf16.mxu0 0
    %319 = vmatpush1.bf16.msra.mxu0 %v298
    %320 = vmatprep.subr.bf16.mxu0 0
    %321 = vmatpush1.bf16.msra.mxu0 %v299
    %322 = vmatprep.subr.bf16.mxu0 0
    %323 = vmatpush1.bf16.msra.mxu0 %v300
    %324 = vmatprep.subr.bf16.mxu0 0
    %325 = vmatpush1.bf16.msra.mxu0 %v301
    %326 = vmatprep.subr.bf16.mxu0 0
    %327 = vmatpush1.bf16.msra.mxu0 0
    %328 = vmatprep.subr.bf16.mxu0 0
    %329 = vmatpush1.bf16.msra.mxu0 0
    %330 = vmatprep.subr.bf16.mxu0 0
    %331 = vmatpush1.bf16.msra.mxu0 0
    %332 = vmatprep.subr.bf16.mxu0 0
    %333 = vmatpush1.bf16.msra.mxu0 0
    %334 = vmatprep.subr.bf16.mxu0 0
    %335 = vmatpush1.bf16.msra.mxu0 0
    %336 = vmatprep.subr.bf16.mxu0 0
    %337 = vmatpush1.bf16.msra.mxu0 0
    %338 = vmatprep.subr.bf16.mxu0 0
    %339 = vmatpush1.bf16.msra.mxu0 0
    %340 = vmatprep.subr.bf16.mxu0 0
    %341 = vmatpush1.bf16.msra.mxu0 0
    %342 = vmatprep.mubr.bf16.mxu0 0
    %343 = vmatmul.mubr.bf16.gmra.mrb[0].mxu0 %v238
    %v344 = vpop.f32.mrb[0].mxu0
    %v345 = vadd.f32 %v260, %v344
    %v346 = vpop.f32.mrb[0].mxu0
    %v347 = vpop.f32.mrb[0].mxu0
    %v348 = vpop.f32.mrb[0].mxu0
    %349 = vdwg.mxu0
    %v350 = vpack.c.bf16 %v345, %v345
    %351 = vst [vmem:[%s7] sm:$0xf] %v350
    // Predicated region
    $region38: #{meta_controller_forward.1} parent=1 // pred_check
      _
    $region39: #{meta_controller_forward.1} parent=1 // pred_check_branch
      %353 = sbr.rel (0) target = $region41
    $region40: #{meta_controller_forward.1} parent=1 // pred_region
      _
    $region41: #{meta_controller_forward.1} parent=1 // pred_fallthru
      _
    // Predicated region
    $region42: #{meta_controller_forward.1} parent=1 // pred_check
      _
    $region43: #{meta_controller_forward.1} parent=1 // pred_check_branch
      %355 = sbr.rel (0) target = $region45
    $region44: #{meta_controller_forward.1} parent=1 // pred_region
      _
    $region45: #{meta_controller_forward.1} parent=1 // pred_fallthru
      _
    %356 = vsyncpa [#allocation3], 1
    %357 = vsyncpa [#allocation5], 1

</llo_original>
